<compile_context>
chip_gen: v5e
topology: v5e:2x2
jax: 0.10.0
libtpu: 0.0.40
codegen_flags: <defaults>
</compile_context>

<pallas_src>
import functools

import jax
import jax.numpy as jnp
from jax.experimental import pallas as pl
from jax.experimental.pallas import tpu as pltpu


def _round_up(x, m):
    return (x + m - 1) // m * m


def _pick_bblk(batch, n_tokens, target_rows):
    """Largest divisor of `batch` with bblk*N <= target_rows; keep >=2 steps."""
    bblk = 1
    for d in range(1, batch + 1):
        if batch % d == 0 and d * n_tokens <= target_rows:
            bblk = d
    if bblk == batch and batch > 1:
        # Leave at least 2 grid steps so the v7x megacore can split the grid.
        for d in range(batch // 2, 0, -1):
            if batch % d == 0:
                bblk = d
                break
    return bblk


def _ea_kernel(q_ref, wk_ref, wv_ref, o_ref, *, s_real, mm_dtype):
    # q_ref:  [Bblk, N, D]      one block of batch elements
    # wk_ref: [D, S_pad]        mk.weight, transposed + zero-padded, bf16
    # wv_ref: [S_pad, D_pad]    mv.weight, transposed + zero-padded, bf16
    # o_ref:  [Bblk, N, D_pad]
    bblk, n, d = q_ref.shape
    s_pad = wk_ref.shape[1]
    d_pad = wv_ref.shape[1]

    # ---- mk: [Bblk*N, D] @ [D, S_pad] -> f32 logits (MXU, bf16 operands) ----
    q = q_ref[...].reshape(bblk * n, d).astype(mm_dtype)
    logits = jnp.dot(q, wk_ref[...], preferred_element_type=jnp.float32)
    logits = logits.reshape(bblk, n, s_pad)

    # ---- softmax over the token axis (per batch element, per S column) ----
    m = jnp.max(logits, axis=1, keepdims=True)                  # [Bblk,1,S_pad]
    e = jnp.exp(logits - m)                                     # EUP
    inv_col = pl.reciprocal(jnp.sum(e, axis=1, keepdims=True), approx=True)
    p = e * inv_col                                             # softmax

    # ---- L1-normalize over the *real* S columns only ----
    if s_pad != s_real:
        col = jax.lax.broadcasted_iota(jnp.int32, (bblk, n, s_pad), 2)
        p = jnp.where(col < s_real, p, 0.0)                     # kill pad cols
    inv_row = pl.reciprocal(jnp.sum(p, axis=2, keepdims=True), approx=True)
    attn = (p * inv_row).astype(mm_dtype)

    # ---- mv: [Bblk*N, S_pad] @ [S_pad, D_pad] -> f32 (MXU) ----
    out = jnp.dot(attn.reshape(bblk * n, s_pad), wv_ref[...],
                  preferred_element_type=jnp.float32)
    o_ref[...] = out.reshape(bblk, n, d_pad).astype(o_ref.dtype)


def external_attention(queries, wk, wv, *, matmul_dtype=jnp.bfloat16,
                       block_rows=512):
    """queries: [B, N, D]; wk: [S, D] (mk.weight); wv: [D, S] (mv.weight)."""
    B, N, D = queries.shape
    S = wk.shape[0]
    assert wk.shape == (S, D) and wv.shape == (D, S)

    s_pad = max(_round_up(S, 128), 128)
    d_pad = max(_round_up(D, 128), 128)

    # One-time weight plumbing: transpose -> lane-dense [K, N] layouts,
    # zero-pad to 128-lane multiples, cast to bf16 for the MXU.
    # TODO(synk): for static module weights, hoist this prep out of the
    # per-call path (precompute once).
    wk_t = wk.T.astype(matmul_dtype)                            # [D, S]
    if s_pad != S:
        wk_t = jnp.zeros((D, s_pad), matmul_dtype).at[:, :S].set(wk_t)
    wv_t = wv.T.astype(matmul_dtype)                            # [S, D]
    if s_pad != S or d_pad != D:
        wv_t = jnp.zeros((s_pad, d_pad), matmul_dtype).at[:S, :D].set(wv_t)

    bblk = _pick_bblk(B, N, block_rows)
    grid = (B // bblk,)

    # Per-step VMEM budget: double-buffered q + out blocks, weights, and the
    # f32 attn intermediates, with 2x headroom (clamped to v7x-safe 64 MiB).
    itemsize = queries.dtype.itemsize
    w_item = jnp.dtype(matmul_dtype).itemsize
    need = (2 * bblk * N * D * itemsize            # q (double-buffered)
            + 2 * bblk * N * d_pad * itemsize      # out (double-buffered)
            + 2 * (D * s_pad + s_pad * d_pad) * w_item   # weights
            + 4 * bblk * N * s_pad * 4)            # logits / e / p / attn (f32)
    vmem_limit = int(min(max(2 * need, 8 << 20), 64 << 20))

    kernel = functools.partial(_ea_kernel, s_real=S, mm_dtype=matmul_dtype)

    out = pl.pallas_call(
        kernel,
        out_shape=jax.ShapeDtypeStruct((B, N, d_pad), queries.dtype),
        grid=grid,
        in_specs=[
            pl.BlockSpec((bblk, N, D), lambda b: (b, 0, 0)),
            pl.BlockSpec((D, s_pad), lambda b: (0, 0)),
            pl.BlockSpec((s_pad, d_pad), lambda b: (0, 0)),
        ],
        out_specs=pl.BlockSpec((bblk, N, d_pad), lambda b: (b, 0, 0)),
        compiler_params=pltpu.CompilerParams(
            dimension_semantics=("parallel",),
            vmem_limit_bytes=vmem_limit),
    )(queries, wk_t, wv_t)

    if d_pad != D:
        out = out[..., :D]
    return out


# ---------------------------- Pure-JAX reference ----------------------------
def external_attention_ref(queries, wk, wv):
    attn = jnp.einsum('bnd,sd->bns', queries, wk)          # mk (no bias)
    attn = jax.nn.softmax(attn, axis=1)                    # softmax over tokens
    attn = attn / jnp.sum(attn, axis=2, keepdims=True)     # L1 norm over S
    return jnp.einsum('bns,ds->bnd', attn, wv)             # mv (no bias)


if __name__ == "__main__":
    B, N, D, S = 2, 8, 32, 64   # batch=2, seq=8, d_model=32, S=64 (default)

    key = jax.random.PRNGKey(0)
    kq, kk, kv = jax.random.split(key, 3)
    queries = jax.random.normal(kq, (B, N, D), jnp.float32)
    wk = 0.1 * jax.random.normal(kk, (S, D), jnp.float32)   # mk.weight [S, D]
    wv = 0.1 * jax.random.normal(kv, (D, S), jnp.float32)   # mv.weight [D, S]

    out = external_attention(queries, wk, wv)
    out = jax.block_until_ready(out)

    ref = external_attention_ref(queries, wk, wv)
    assert out.shape == (B, N, D)
    # Tolerance accounts for bf16 MXU operands + approx (EUP) reciprocals.
    assert jnp.allclose(out, ref, atol=2e-3, rtol=2e-2), (
        float(jnp.max(jnp.abs(out - ref))))

    print("KERNEL_OK")
</pallas_src>

<mosaic_0001>
module attributes {stable_mosaic.version = 11 : i64} {
  func.func @_ea_kernel(%arg0: i32, %arg1: memref<1x8x32xf32, #tpu.memory_space<vmem>>, %arg2: memref<32x128xbf16, #tpu.memory_space<vmem>>, %arg3: memref<128x128xbf16, #tpu.memory_space<vmem>>, %arg4: memref<1x8x128xf32, #tpu.memory_space<vmem>>) attributes {dimension_semantics = [#tpu.dimension_semantics<parallel>], iteration_bounds = array<i64: 2>, scalar_prefetch = 0 : i64, scratch_operands = 0 : i64, tpu.core_type = #tpu.core_type<tc>, window_params = [{transform_indices = @transform_0, window_bounds = array<i64: 1, 8, 32>}, {pipeline_mode = #tpu.pipeline_mode<synchronous>, transform_indices = @transform_1, window_bounds = array<i64: 32, 128>}, {pipeline_mode = #tpu.pipeline_mode<synchronous>, transform_indices = @transform_2, window_bounds = array<i64: 128, 128>}, {transform_indices = @transform_3, window_bounds = array<i64: 1, 8, 128>}]} {
    %c0 = arith.constant 0 : index
    %c0_0 = arith.constant 0 : index
    %c0_1 = arith.constant 0 : index
    %0 = vector.load %arg1[%c0, %c0_0, %c0_1] : memref<1x8x32xf32, #tpu.memory_space<vmem>>, vector<1x8x32xf32>
    %1 = vector.shape_cast %0 : vector<1x8x32xf32> to vector<8x32xf32>
    %2 = arith.truncf %1 : vector<8x32xf32> to vector<8x32xbf16>
    %c0_2 = arith.constant 0 : index
    %c0_3 = arith.constant 0 : index
    %3 = vector.load %arg2[%c0_2, %c0_3] : memref<32x128xbf16, #tpu.memory_space<vmem>>, vector<32x128xbf16>
    %cst = arith.constant dense<0.000000e+00> : vector<8x128xf32>
    %4 = tpu.matmul %2, %3, %cst {dimension_numbers = #tpu.dot_dimension_numbers<[1], [0], [0], [1], [0, 0, 1, 1], [], []>} : vector<8x32xbf16>, vector<32x128xbf16>, vector<8x128xf32> -> vector<8x128xf32>
    %5 = vector.shape_cast %4 : vector<8x128xf32> to vector<1x8x128xf32>
    %cst_4 = arith.constant dense<0xFF800000> : vector<1x128xf32>
    %6 = vector.multi_reduction <maximumf>, %5, %cst_4 [1] : vector<1x8x128xf32> to vector<1x128xf32>
    %7 = vector.shape_cast %6 : vector<1x128xf32> to vector<1x1x128xf32>
    %8 = vector.broadcast %7 : vector<1x1x128xf32> to vector<1x8x128xf32>
    %9 = arith.subf %5, %8 : vector<1x8x128xf32>
    %10 = math.exp %9 : vector<1x8x128xf32>
    %cst_5 = arith.constant dense<0.000000e+00> : vector<1x128xf32>
    %11 = vector.multi_reduction <add>, %10, %cst_5 [1] : vector<1x8x128xf32> to vector<1x128xf32>
    %12 = vector.shape_cast %11 : vector<1x128xf32> to vector<1x1x128xf32>
    %13 = tpu.reciprocal %12 {approx = true} : vector<1x1x128xf32> -> vector<1x1x128xf32>
    %14 = vector.broadcast %13 : vector<1x1x128xf32> to vector<1x8x128xf32>
    %15 = arith.mulf %10, %14 : vector<1x8x128xf32>
    %16 = tpu.iota {dimensions = array<i32: 2>} : vector<1x8x128xi32>
    %c64_i32 = arith.constant 64 : i32
    %17 = vector.broadcast %c64_i32 : i32 to vector<1x8x128xi32>
    %18 = arith.cmpi slt, %16, %17 : vector<1x8x128xi32>
    %cst_6 = arith.constant 0.000000e+00 : f32
    %19 = vector.broadcast %cst_6 : f32 to vector<1x8x128xf32>
    %20 = arith.select %18, %15, %19 : vector<1x8x128xi1>, vector<1x8x128xf32>
    %cst_7 = arith.constant dense<0.000000e+00> : vector<1x8xf32>
    %21 = vector.multi_reduction <add>, %20, %cst_7 [2] : vector<1x8x128xf32> to vector<1x8xf32>
    %22 = vector.shape_cast %21 : vector<1x8xf32> to vector<1x8x1xf32>
    %23 = tpu.reciprocal %22 {approx = true} : vector<1x8x1xf32> -> vector<1x8x1xf32>
    %24 = vector.broadcast %23 : vector<1x8x1xf32> to vector<1x8x128xf32>
    %25 = arith.mulf %20, %24 : vector<1x8x128xf32>
    %26 = arith.truncf %25 : vector<1x8x128xf32> to vector<1x8x128xbf16>
    %27 = vector.shape_cast %26 : vector<1x8x128xbf16> to vector<8x128xbf16>
    %c0_8 = arith.constant 0 : index
    %c0_9 = arith.constant 0 : index
    %28 = vector.load %arg3[%c0_8, %c0_9] : memref<128x128xbf16, #tpu.memory_space<vmem>>, vector<128x128xbf16>
    %cst_10 = arith.constant dense<0.000000e+00> : vector<8x128xf32>
    %29 = tpu.matmul %27, %28, %cst_10 {dimension_numbers = #tpu.dot_dimension_numbers<[1], [0], [0], [1], [0, 0, 1, 1], [], []>} : vector<8x128xbf16>, vector<128x128xbf16>, vector<8x128xf32> -> vector<8x128xf32>
    %30 = vector.shape_cast %29 : vector<8x128xf32> to vector<1x8x128xf32>
    %c0_11 = arith.constant 0 : index
    %c0_12 = arith.constant 0 : index
    %c0_13 = arith.constant 0 : index
    %31 = vector.load %arg4[%c0_11, %c0_12, %c0_13] : memref<1x8x128xf32, #tpu.memory_space<vmem>>, vector<1x8x128xf32>
    tpu.vector_store %arg4[%c0_11, %c0_12, %c0_13], %30 {strides = array<i32>} : memref<1x8x128xf32, #tpu.memory_space<vmem>>, vector<1x8x128xf32>,
    return
  }
  func.func @transform_0(%arg0: i32) -> (i32, i32, i32) {
    %c0_i32 = arith.constant 0 : i32
    %c0_i32_0 = arith.constant 0 : i32
    %c0_i32_1 = arith.constant 0 : i32
    return %arg0, %c0_i32, %c0_i32_0 : i32, i32, i32
  }
  func.func @transform_1(%arg0: i32) -> (i32, i32) {
    %c0_i32 = arith.constant 0 : i32
    %c0_i32_0 = arith.constant 0 : i32
    %c0_i32_1 = arith.constant 0 : i32
    return %c0_i32, %c0_i32_0 : i32, i32
  }
  func.func @transform_2(%arg0: i32) -> (i32, i32) {
    %c0_i32 = arith.constant 0 : i32
    %c0_i32_0 = arith.constant 0 : i32
    %c0_i32_1 = arith.constant 0 : i32
    return %c0_i32, %c0_i32_0 : i32, i32
  }
  func.func @transform_3(%arg0: i32) -> (i32, i32, i32) {
    %c0_i32 = arith.constant 0 : i32
    %c0_i32_0 = arith.constant 0 : i32
    %c0_i32_1 = arith.constant 0 : i32
    return %arg0, %c0_i32, %c0_i32_0 : i32, i32, i32
  }
}

</mosaic_0001>

<llo_original>
// kernel: tpu_custom_call.1
$region0: #{tpu_custom_call.1}
  #allocation0 [shape = 'u32[]', space=smem, size = 0x4, offset = 0x4, fixed_abs, tag = 'smem constant byte address 0x4 - core index']
  #allocation1 [shape = 'u32[72,128]{1,0:T(1,128)}', space=vmem, size = 0x9000, scoped, tag = 'internal scratch']
  %s0 = inlined_call_operand.hbm [shape: f32[2,8,32], index: 0, kind: input, shape index: {}]
  %s1 = inlined_call_operand.hbm [shape: bf16[32,128], index: 1, kind: input, shape index: {}]
  %s2 = inlined_call_operand.hbm [shape: bf16[128,128], index: 2, kind: input, shape index: {}]
  %s3 = inlined_call_operand.hbm [shape: f32[2,8,128], index: 3, kind: output, shape index: {}]
  %s4 = sld [smem:[#allocation0]]
  $region57: #{tpu_custom_call.1} parent=0
    _
  %s6 = ssub.s32 1, %s4
  %s7 = scalar_select 0, %s6, %s4
  $region1: #{tpu_custom_call.1} parent=0
    #allocation2 [shape = 'u8[8192]{0}', space=vmem, size = 0x2000, scoped, tag = 'input window, operand 0']
    #allocation3 [shape = 's32[2]{0}', space=sflag, size = 0x8, scoped, tag = 'scoped memory for tpu_custom_call.1']
    #allocation4 [shape = 's32[2]{0}', space=sflag, size = 0x8, scoped, tag = 'scoped memory for tpu_custom_call.1']
    #allocation5 [shape = 'u8[8192]{0}', space=vmem, size = 0x2000, scoped, tag = 'input window, operand 1, single buffered']
    #allocation6 [shape = 's32[1]{0}', space=sflag, size = 0x4, scoped, tag = 'scoped memory for tpu_custom_call.1']
    #allocation7 [shape = 'u8[32768]{0}', space=vmem, size = 0x8000, scoped, tag = 'input window, operand 2, single buffered']
    #allocation8 [shape = 'u8[8192]{0}', space=vmem, size = 0x2000, scoped, tag = 'output window, operand 0']
    %8 = vsyncpa [#allocation3], 0
    %s9 = scalar_lea.sflag [#allocation3], 1
    %10 = vsyncpa %s9, 0
    %11 = vsyncpa [#allocation6], 0
    %12 = vsyncpa [#allocation4], 0
    %s13 = scalar_lea.sflag [#allocation4], 1
    %14 = vsyncpa %s13, 0
    loop: start=0, step=1, limit=4
    $region2: #{tpu_custom_call.1} parent=1 // loop_pre_header
      _
    $region3: #{tpu_custom_call.1} parent=1 // loop_header
      %s16 = sphi 0, %s20
      %p17 = scmp.ge.s32.totalorder %s16, 4
      %s26 = sphi 0, %s28
      %s29 = sphi 0, %s26
      %s30 = sphi 0, %s29
      %s46 = sphi 0, %s30
      %s50 = sphi 0, %s50
      %s52 = sphi 0, %s50
      %s53 = sphi 0, %s52
      %s67 = sphi 0, %s53
      %s71 = sphi 0, %s71
      %s73 = sphi 0, %s71
      %s74 = sphi 0, %s73
      %s88 = sphi 0, %s74
      %s94 = sphi 0, %s96
      %s97 = sphi 0, %s94
      %s98 = sphi 0, %s97
      %s114 = sphi 0, %s98
    $region4: #{tpu_custom_call.1} parent=1 // loop_header_branch
      %19 = sbr.rel (%p17) target = $region8
    $region5: #{tpu_custom_call.1} parent=1 // loop_body
      %s21 = ssub.s32 %s16, 1
      %s22 = ssub.s32 %s16, 2
      %s23 = sadd.s32 %s16, 1
      %s24 = ssub.s32 %s16, %s23
      %p25 = scmp.eq.s32.totalorder %s24, 0
      %s27 = sadd.s32 %s26, 1
      %s28 = scalar_select %p25, %s26, %s27
      %p31 = pneg %p25
      %p32 = scmp.eq.s32.totalorder %s16, 1
      %p33 = por %p31, %p32
      %p34 = scmp.ne.s32.totalorder %s26, %s29
      %p35 = scmp.eq.s32.totalorder %s16, 0
      %p36 = por %p34, %p35
      %p37 = scmp.ne.s32.totalorder %s26, %s29
      %p38 = scmp.eq.s32.totalorder %s21, 1
      %p39 = por %p37, %p38
      %p40 = scmp.ne.s32.totalorder %s29, %s30
      %p41 = scmp.eq.s32.totalorder %s21, 0
      %p42 = por %p40, %p41
      %p43 = scmp.ne.s32.totalorder %s29, %s30
      %p44 = scmp.eq.s32.totalorder %s22, 1
      %p45 = por %p43, %p44
      %p47 = scmp.ne.s32.totalorder %s30, %s46
      %p48 = scmp.eq.s32.totalorder %s22, 0
      %p49 = por %p47, %p48
      %s51 = sadd.s32 %s50, 1
      %p54 = scmp.eq.s32.totalorder %s16, 1
      %p55 = scmp.ne.s32.totalorder %s50, %s52
      %p56 = scmp.eq.s32.totalorder %s16, 0
      %p57 = por %p55, %p56
      %p58 = scmp.ne.s32.totalorder %s50, %s52
      %p59 = scmp.eq.s32.totalorder %s21, 1
      %p60 = por %p58, %p59
      %p61 = scmp.ne.s32.totalorder %s52, %s53
      %p62 = scmp.eq.s32.totalorder %s21, 0
      %p63 = por %p61, %p62
      %p64 = scmp.ne.s32.totalorder %s52, %s53
      %p65 = scmp.eq.s32.totalorder %s22, 1
      %p66 = por %p64, %p65
      %p68 = scmp.ne.s32.totalorder %s53, %s67
      %p69 = scmp.eq.s32.totalorder %s22, 0
      %p70 = por %p68, %p69
      %s72 = sadd.s32 %s71, 1
      %p75 = scmp.eq.s32.totalorder %s16, 1
      %p76 = scmp.ne.s32.totalorder %s71, %s73
      %p77 = scmp.eq.s32.totalorder %s16, 0
      %p78 = por %p76, %p77
      %p79 = scmp.ne.s32.totalorder %s71, %s73
      %p80 = scmp.eq.s32.totalorder %s21, 1
      %p81 = por %p79, %p80
      %p82 = scmp.ne.s32.totalorder %s73, %s74
      %p83 = scmp.eq.s32.totalorder %s21, 0
      %p84 = por %p82, %p83
      %p85 = scmp.ne.s32.totalorder %s73, %s74
      %p86 = scmp.eq.s32.totalorder %s22, 1
      %p87 = por %p85, %p86
      %p89 = scmp.ne.s32.totalorder %s74, %s88
      %p90 = scmp.eq.s32.totalorder %s22, 0
      %p91 = por %p89, %p90
      %s92 = ssub.s32 %s16, %s23
      %p93 = scmp.eq.s32.totalorder %s92, 0
      %s95 = sadd.s32 %s94, 1
      %s96 = scalar_select %p93, %s94, %s95
      %p99 = pneg %p93
      %p100 = scmp.eq.s32.totalorder %s16, 1
      %p101 = por %p99, %p100
      %p102 = scmp.ne.s32.totalorder %s94, %s97
      %p103 = scmp.eq.s32.totalorder %s16, 0
      %p104 = por %p102, %p103
      %p105 = scmp.ne.s32.totalorder %s94, %s97
      %p106 = scmp.eq.s32.totalorder %s21, 1
      %p107 = por %p105, %p106
      %p108 = scmp.ne.s32.totalorder %s97, %s98
      %p109 = scmp.eq.s32.totalorder %s21, 0
      %p110 = por %p108, %p109
      %p111 = scmp.ne.s32.totalorder %s97, %s98
      %p112 = scmp.eq.s32.totalorder %s22, 1
      %p113 = por %p111, %p112
      %p115 = scmp.ne.s32.totalorder %s98, %s114
      %p116 = scmp.eq.s32.totalorder %s22, 0
      %p117 = por %p115, %p116
      %p118 = scmp.le.s32.totalorder 1, %s16
      %p119 = scmp.lt.s32.totalorder %s16, 3
      %p120 = pnand %p118, %p119
      %p121 = pneg %p120
      // Predicated region
      $region9: #{tpu_custom_call.1} parent=5 // pred_check
        _
      $region10: #{tpu_custom_call.1} parent=5 // pred_check_branch
        %123 = sbr.rel (%p120) target = $region12
      $region11: #{tpu_custom_call.1} parent=5 // pred_region
        %s124 = ssub.s32 %s16, 1
        // Predicated region
        $region13: #{tpu_custom_call.1} parent=11 // pred_check
          %p125 = pneg %p63
        $region14: #{tpu_custom_call.1} parent=11 // pred_check_branch
          %127 = sbr.rel (%p125) target = $region16
        $region15: #{tpu_custom_call.1} parent=11 // pred_region
          %129 = vsyncadd [#allocation6], 0
          %s130 = sshll.u32 %s1, 4
          %s131 = int_to_ptr.hbm [resolvable:$true] %s130
          %s132 = sshll.u32 [#allocation5], 4
          %s133 = int_to_ptr.vmem [resolvable:$true] %s132
          %138 = dma.hbm_to_vmem [thread:$0]  %s131, 256, %s133, [#allocation6], 64, 64, 4
        $region16: #{tpu_custom_call.1} parent=11 // pred_fallthru
          _
        // Predicated region
        $region17: #{tpu_custom_call.1} parent=11 // pred_check
          %p139 = pneg %p84
        $region18: #{tpu_custom_call.1} parent=11 // pred_check_branch
          %141 = sbr.rel (%p139) target = $region20
        $region19: #{tpu_custom_call.1} parent=11 // pred_region
          %143 = vsyncadd [#allocation6], 0
          %s144 = sshll.u32 %s2, 4
          %s145 = int_to_ptr.hbm [resolvable:$true] %s144
          %s146 = sshll.u32 [#allocation7], 4
          %s147 = int_to_ptr.vmem [resolvable:$true] %s146
          %152 = dma.hbm_to_vmem [thread:$0]  %s145, 1024, %s147, [#allocation6], 64, 64, 4
        $region20: #{tpu_custom_call.1} parent=11 // pred_fallthru
          _
      $region12: #{tpu_custom_call.1} parent=5 // pred_fallthru
        _
      %p153 = scmp.lt.s32.totalorder %s16, 2
      // Predicated region
      $region21: #{tpu_custom_call.1} parent=5 // pred_check
        %p154 = pneg %p153
      $region22: #{tpu_custom_call.1} parent=5 // pred_check_branch
        %156 = sbr.rel (%p154) target = $region24
      $region23: #{tpu_custom_call.1} parent=5 // pred_region
        // Predicated region
        $region25: #{tpu_custom_call.1} parent=23 // pred_check
          %p157 = pneg %p36
        $region26: #{tpu_custom_call.1} parent=23 // pred_check_branch
          %159 = sbr.rel (%p157) target = $region28
        $region27: #{tpu_custom_call.1} parent=23 // pred_region
          %s160 = sand.u32 %s26, 1
          %s161 = scalar_lea.sflag [#allocation3], %s160
          %s162 = sand.u32 %s26, 1
          %s163 = smul.addr %s162, 8
          %s164 = scalar_lea.vmem [#allocation2], %s163
          %166 = vsyncadd %s161, 0
          %s167 = smul.addr %s16, 8
          %s168 = scalar_lea.hbm %s0, %s167
          %s170 = sshll.u32 %s168, 4
          %s171 = int_to_ptr.hbm [resolvable:$true] %s170
          %s172 = sshll.u32 %s164, 4
          %s173 = int_to_ptr.vmem [resolvable:$true] %s172
          %175 = dma.hbm_to_vmem [thread:$0]  %s171, 128, %s173, %s161
        $region28: #{tpu_custom_call.1} parent=23 // pred_fallthru
          _
      $region24: #{tpu_custom_call.1} parent=5 // pred_fallthru
        _
      %p176 = scmp.le.s32.totalorder 1, %s16
      %p177 = scmp.lt.s32.totalorder %s16, 3
      %p178 = pnand %p176, %p177
      %p179 = pneg %p178
      // Predicated region
      $region29: #{tpu_custom_call.1} parent=5 // pred_check
        _
      $region30: #{tpu_custom_call.1} parent=5 // pred_check_branch
        %181 = sbr.rel (%p178) target = $region32
      $region31: #{tpu_custom_call.1} parent=5 // pred_region
        %s182 = ssub.s32 %s16, 1
        %s183 = sand.u32 %s29, 1
        %s184 = scalar_lea.sflag [#allocation3], %s183
        %s185 = sand.u32 %s29, 1
        %s186 = smul.addr %s185, 8
        %s187 = scalar_lea.vmem [#allocation2], %s186
        // Predicated region
        $region33: #{tpu_custom_call.1} parent=31 // pred_check
          %p188 = pneg %p42
        $region34: #{tpu_custom_call.1} parent=31 // pred_check_branch
          %190 = sbr.rel (%p188) target = $region36
        $region35: #{tpu_custom_call.1} parent=31 // pred_region
          %192 = dma.done %s184, 128
        $region36: #{tpu_custom_call.1} parent=31 // pred_fallthru
          _
        // Predicated region
        $region37: #{tpu_custom_call.1} parent=31 // pred_check
          %p193 = pneg %p63
        $region38: #{tpu_custom_call.1} parent=31 // pred_check_branch
          %195 = sbr.rel (%p193) target = $region40
        $region39: #{tpu_custom_call.1} parent=31 // pred_region
          %197 = dma.done [#allocation6], 256
        $region40: #{tpu_custom_call.1} parent=31 // pred_fallthru
          _
        // Predicated region
        $region41: #{tpu_custom_call.1} parent=31 // pred_check
          %p198 = pneg %p84
        $region42: #{tpu_custom_call.1} parent=31 // pred_check_branch
          %200 = sbr.rel (%p198) target = $region44
        $region43: #{tpu_custom_call.1} parent=31 // pred_region
          %202 = dma.done [#allocation6], 1024
        $region44: #{tpu_custom_call.1} parent=31 // pred_fallthru
          _
        %s203 = sand.u32 %s29, 1
        %s204 = scalar_lea.sflag [#allocation3], %s203
        %s205 = sand.u32 %s29, 1
        %s206 = smul.addr %s205, 8
        %s207 = scalar_lea.vmem [#allocation2], %s206
        %p208 = pneg %p42
        %p209 = pneg %p39
        %p210 = pneg %p63
        %p211 = pneg %p60
        %p212 = pneg %p84
        %p213 = pneg %p81
        %p214 = pneg %p110
        %p215 = pneg %p107
        %s216 = sand.u32 %s97, 1
        %s217 = scalar_lea.sflag [#allocation4], %s216
        %s218 = sand.u32 %s97, 1
        %s219 = smul.addr %s218, 8
        %s220 = scalar_lea.vmem [#allocation8], %s219
        %v222 = vld [vmem:[%s187] sm:$0xff]
        %v223 = vpack.c.bf16 %v222, %v222
        %v224 = vld [vmem:[#allocation5] sm:$0xf]
        %v225 = vld [vmem:[#allocation5 + $0x4] sm:$0xf]
        %v226 = vld [vmem:[#allocation5 + $0x8] sm:$0xf]
        %v227 = vld [vmem:[#allocation5 + $0xc] sm:$0xf]
        %v232 = vunpack.c.l.b16 %v224
        %v233 = vunpack.c.l.b16 %v225
        %v234 = vunpack.c.l.b16 %v226
        %v235 = vunpack.c.l.b16 %v227
        %v236 = vpack.c.b16 %v233, %v232
        %v237 = vpack.c.b16 %v235, %v234
        %vm240 = vcmask 261120
        %v242 = vsel %vm240, %v223, 0
        %244 = vmatpush.bf16.msra.mxu0 0
        %245 = vmatpush.bf16.msra.mxu0 0
        %246 = vmatpush.bf16.msra.mxu0 0
        %247 = vmatpush.bf16.msra.mxu0 0
        %248 = vmatpush.bf16.msra.mxu0 0
        %249 = vmatpush.bf16.msra.mxu0 0
        %250 = vmatpush.bf16.msra.mxu0 %v237
        %251 = vmatpush.bf16.msra.mxu0 %v236
        %252 = vmatmul.bf16.gmra.mxu0 %v242
        %v253 = vpop.f32.mrf.mxu0
        %v254 = vadd.f32 0.0, %v253
        %v255 = vpop.f32.mrf.mxu0
        %256 = vdwg.mxu0
        %v257 = vrot.slane %v254, 4
        %v258 = vmax.f32 %v254, %v257
        %v259 = vrot.slane %v258, 2
        %v260 = vmax.f32 %v258, %v259
        %v261 = vrot.slane %v260, 1
        %v262 = vmax.f32 %v260, %v261
        %v263 = vsub.f32 %v254, %v262
        %v264 = vmul.f32 %v263, 1.442695
        %v265 = vpow.pop %v264
        %v266 = vrot.slane %v265, 4
        %v267 = vadd.f32 %v265, %v266
        %v268 = vrot.slane %v267, 2
        %v269 = vadd.f32 %v267, %v268
        %v270 = vrot.slane %v269, 1
        %v271 = vadd.f32 %v269, %v270
        %v272 = vrcp.pop %v271
        %v273 = vmul.f32 %v265, %v272
        %v274 = vlaneseq
        %v275 = vand.u32 %v274, 127
        %vm276 = vcmp.lt.s32.totalorder %v275, 64
        %v277 = vsel %vm276, %v273, 0.0
        %278 = vadd.xlane.f32.xlu0 %v277
        %v279 = vpop.xlane.xlu0 %278
        %v280 = vrcp.pop %v279
        %v281 = vmul.f32 %v277, %v280
        %v282 = vpack.c.bf16 %v281, %v281
        %v283 = vld [vmem:[#allocation7] sm:$0xf]
        %v284 = vld [vmem:[#allocation7 + $0x4] sm:$0xf]
        %v285 = vld [vmem:[#allocation7 + $0x8] sm:$0xf]
        %v286 = vld [vmem:[#allocation7 + $0xc] sm:$0xf]
        %v287 = vld [vmem:[#allocation7 + $0x10] sm:$0xf]
        %v288 = vld [vmem:[#allocation7 + $0x14] sm:$0xf]
        %v289 = vld [vmem:[#allocation7 + $0x18] sm:$0xf]
        %v290 = vld [vmem:[#allocation7 + $0x1c] sm:$0xf]
        %v291 = vld [vmem:[#allocation7 + $0x20] sm:$0xf]
        %v292 = vld [vmem:[#allocation7 + $0x24] sm:$0xf]
        %v293 = vld [vmem:[#allocation7 + $0x28] sm:$0xf]
        %v294 = vld [vmem:[#allocation7 + $0x2c] sm:$0xf]
        %v295 = vld [vmem:[#allocation7 + $0x30] sm:$0xf]
        %v296 = vld [vmem:[#allocation7 + $0x34] sm:$0xf]
        %v297 = vld [vmem:[#allocation7 + $0x38] sm:$0xf]
        %v298 = vld [vmem:[#allocation7 + $0x3c] sm:$0xf]
        %v315 = vunpack.c.l.b16 %v283
        %v316 = vunpack.c.l.b16 %v284
        %v317 = vunpack.c.l.b16 %v285
        %v318 = vunpack.c.l.b16 %v286
        %v319 = vunpack.c.l.b16 %v287
        %v320 = vunpack.c.l.b16 %v288
        %v321 = vunpack.c.l.b16 %v289
        %v322 = vunpack.c.l.b16 %v290
        %v323 = vunpack.c.l.b16 %v291
        %v324 = vunpack.c.l.b16 %v292
        %v325 = vunpack.c.l.b16 %v293
        %v326 = vunpack.c.l.b16 %v294
        %v327 = vunpack.c.l.b16 %v295
        %v328 = vunpack.c.l.b16 %v296
        %v329 = vunpack.c.l.b16 %v297
        %v330 = vunpack.c.l.b16 %v298
        %v331 = vpack.c.b16 %v316, %v315
        %v332 = vpack.c.b16 %v318, %v317
        %v333 = vpack.c.b16 %v320, %v319
        %v334 = vpack.c.b16 %v322, %v321
        %v335 = vpack.c.b16 %v324, %v323
        %v336 = vpack.c.b16 %v326, %v325
        %v337 = vpack.c.b16 %v328, %v327
        %v338 = vpack.c.b16 %v330, %v329
        %347 = vmatpush.bf16.msra.mxu0 %v338
        %348 = vmatpush.bf16.msra.mxu0 %v337
        %349 = vmatpush.bf16.msra.mxu0 %v336
        %350 = vmatpush.bf16.msra.mxu0 %v335
        %351 = vmatpush.bf16.msra.mxu0 %v334
        %352 = vmatpush.bf16.msra.mxu0 %v333
        %353 = vmatpush.bf16.msra.mxu0 %v332
        %354 = vmatpush.bf16.msra.mxu0 %v331
        %355 = vmatmul.bf16.gmra.mxu0 %v282
        %v356 = vpop.f32.mrf.mxu0
        %v357 = vadd.f32 0.0, %v356
        %v358 = vpop.f32.mrf.mxu0
        %359 = vdwg.mxu0
        %360 = vst [vmem:[%s220] sm:$0xff] %v357
        %s361 = sand.u32 %s97, 1
        %s362 = scalar_lea.sflag [#allocation4], %s361
        %s363 = sand.u32 %s97, 1
        %s364 = smul.addr %s363, 8
        %s365 = scalar_lea.vmem [#allocation8], %s364
        // Predicated region
        $region45: #{tpu_custom_call.1} parent=31 // pred_check
          %p366 = pneg %p107
        $region46: #{tpu_custom_call.1} parent=31 // pred_check_branch
          %368 = sbr.rel (%p366) target = $region48
        $region47: #{tpu_custom_call.1} parent=31 // pred_region
          %370 = vsyncadd %s362, 0
          %s371 = smul.addr %s21, 8
          %s372 = scalar_lea.hbm %s3, %s371
          %s374 = sshll.u32 %s365, 4
          %s375 = int_to_ptr.vmem [resolvable:$true] %s374
          %s376 = sshll.u32 %s372, 4
          %s377 = int_to_ptr.hbm [resolvable:$true] %s376
          %379 = dma.vmem_to_hbm [thread:$0]  %s375, 128, %s377, %s362
        $region48: #{tpu_custom_call.1} parent=31 // pred_fallthru
          _
      $region32: #{tpu_custom_call.1} parent=5 // pred_fallthru
        _
      %p380 = scmp.le.s32.totalorder 2, %s16
      // Predicated region
      $region49: #{tpu_custom_call.1} parent=5 // pred_check
        %p381 = pneg %p380
      $region50: #{tpu_custom_call.1} parent=5 // pred_check_branch
        %383 = sbr.rel (%p381) target = $region52
      $region51: #{tpu_custom_call.1} parent=5 // pred_region
        %s384 = ssub.s32 %s16, 2
        // Predicated region
        $region53: #{tpu_custom_call.1} parent=51 // pred_check
          %p385 = pneg %p113
        $region54: #{tpu_custom_call.1} parent=51 // pred_check_branch
          %387 = sbr.rel (%p385) target = $region56
        $region55: #{tpu_custom_call.1} parent=51 // pred_region
          %s388 = sand.u32 %s98, 1
          %s389 = scalar_lea.sflag [#allocation4], %s388
          %s390 = sand.u32 %s98, 1
          %s391 = smul.addr %s390, 8
          %s392 = scalar_lea.vmem [#allocation8], %s391
          %394 = dma.done %s389, 128
        $region56: #{tpu_custom_call.1} parent=51 // pred_fallthru
          _
      $region52: #{tpu_custom_call.1} parent=5 // pred_fallthru
        _
    $region6: #{tpu_custom_call.1} parent=1 // loop_footer
      %s20 = sadd.s32 1, %s16
    $region7: #{tpu_custom_call.1} parent=1 // loop_footer_branch
      %15 = sbr.rel target = $region3
    $region8: #{tpu_custom_call.1} parent=1 // loop_exit
      _
    %395 = vsyncpa [#allocation3], 1
    %s396 = scalar_lea.sflag [#allocation3], 1
    %397 = vsyncpa %s396, 1
    %398 = vsyncpa [#allocation6], 1
    %399 = vsyncpa [#allocation4], 1
    %s400 = scalar_lea.sflag [#allocation4], 1
    %401 = vsyncpa %s400, 1

</llo_original>
